<compile_context>
chip_gen: v5e
topology: v5e:2x2
jax: 0.10.0
libtpu: 0.0.40
codegen_flags: <defaults>
</compile_context>

<pallas_src>
import functools

import jax
import jax.numpy as jnp
from jax import lax
from jax.experimental import pallas as pl
from jax.experimental.pallas import tpu as pltpu


def _cbr_kernel(x_ref, t_ref, gamma_ref, beta_ref, rr_ref, rb_ref,
                out_ref, acc_ref, bn_ref, *, count, eps):
    """Fused conv3x3 (Toeplitz matmul) + BatchNorm (batch stats) + ReLU.

    x_ref   : (TH+2, Wp*Cin)      padded input rows for this tile (1-row halo)
    t_ref   : (3*Wp*Cin, W*Cout)  block-Toeplitz conv weights
    gamma_ref, beta_ref : (1, Cout)
    rr_ref  : (W*Cout, Cout)      reduce (w,co)-tiled lanes -> per-channel
    rb_ref  : (Cout, W*Cout)      broadcast per-channel -> (w,co)-tiled lanes
    out_ref : (TH, W*Cout)        lane-dense output block
    acc_ref : (2, W*Cout) scratch: row0 = sum, row1 = sum((x-mean)^2)
    bn_ref  : (2, W*Cout) scratch: row0 = mean (later: scale), row1 = shift
    """
    p = pl.program_id(0)
    n = pl.program_id(1)
    t = pl.program_id(2)
    is_first = jnp.logical_and(n == 0, t == 0)
    is_last = jnp.logical_and(n == pl.num_programs(1) - 1,
                              t == pl.num_programs(2) - 1)

    th = out_ref.shape[0]

    # --- conv: single MXU matmul, K = 3*Wp*Cin, output lanes = W*Cout ---------
    x = x_ref[...]                                           # (TH+2, Wp*Cin)
    lhs = jnp.concatenate([x[0:th, :], x[1:th + 1, :], x[2:th + 2, :]], axis=1)
    conv = jnp.dot(lhs, t_ref[...], preferred_element_type=jnp.float32)

    # --- pass 0: global per-channel sum -> mean --------------------------------
    @pl.when(jnp.logical_and(p == 0, is_first))
    def _init():
        acc_ref[...] = jnp.zeros_like(acc_ref)

    @pl.when(p == 0)
    def _accum_sum():
        acc_ref[0:1, :] = acc_ref[0:1, :] + jnp.sum(conv, axis=0, keepdims=True)

    @pl.when(jnp.logical_and(p == 0, is_last))
    def _finalize_mean():
        mean_c = jnp.dot(acc_ref[0:1, :], rr_ref[...],
                         preferred_element_type=jnp.float32) / count    # (1, Cout)
        bn_ref[0:1, :] = jnp.dot(mean_c, rb_ref[...],
                                 preferred_element_type=jnp.float32)    # tiled mean

    # --- pass 1: global centered sum-of-squares -> var (two-pass, biased) ------
    @pl.when(p == 1)
    def _accum_var():
        d = conv - bn_ref[0:1, :]
        acc_ref[1:2, :] = acc_ref[1:2, :] + jnp.sum(d * d, axis=0, keepdims=True)

    @pl.when(jnp.logical_and(p == 1, is_last))
    def _finalize_scale():
        var_c = jnp.dot(acc_ref[1:2, :], rr_ref[...],
                        preferred_element_type=jnp.float32) / count     # (1, Cout)
        mean_c = jnp.dot(acc_ref[0:1, :], rr_ref[...],
                         preferred_element_type=jnp.float32) / count    # (1, Cout)
        inv = lax.rsqrt(var_c + eps)
        scale_c = gamma_ref[...] * inv
        shift_c = beta_ref[...] - mean_c * scale_c
        bn_ref[0:1, :] = jnp.dot(scale_c, rb_ref[...],
                                 preferred_element_type=jnp.float32)    # tiled scale
        bn_ref[1:2, :] = jnp.dot(shift_c, rb_ref[...],
                                 preferred_element_type=jnp.float32)    # tiled shift

    # --- pass 2: normalize + affine + ReLU, lane-dense store -------------------
    @pl.when(p == 2)
    def _normalize():
        y = conv * bn_ref[0:1, :] + bn_ref[1:2, :]
        out_ref[...] = jnp.maximum(y, 0.0).astype(out_ref.dtype)


def conv_batch_relu(x_nchw, weight_oihw, gamma, beta, *, tile_h=8):
    """x_nchw: (N, Cin, H, W) f32; weight_oihw: (Cout, Cin, 3, 3) f32 (no bias)."""
    N, Cin, H, W = x_nchw.shape
    Cout = weight_oihw.shape[0]
    th = tile_h if (H % tile_h == 0) else H
    ht = H // th
    Wp = W + 2
    WC = W * Cout

    # ---- layout glue: NCHW -> NHWC, zero halo, overlapped row tiles ----------
    # TODO(synk): fold pad + halo construction into the kernel (manual halo DMA /
    # masked edge taps) to remove this wrapper HBM round-trip; accept NHWC input
    # at the API boundary if the caller allows.
    x_nhwc = jnp.transpose(x_nchw, (0, 2, 3, 1)).astype(jnp.float32)
    x_pad = jnp.pad(x_nhwc, ((0, 0), (1, 1), (1, 1), (0, 0)))       # (N, H+2, Wp, Cin)
    rows = jnp.arange(ht)[:, None] * th + jnp.arange(th + 2)[None, :]   # (ht, th+2)
    x_tiles = x_pad[:, rows].reshape(N, ht, th + 2, Wp * Cin)

    # Block-Toeplitz conv weights: conv3x3 == (TH, 3*Wp*Cin) @ (3*Wp*Cin, W*Cout).
    w_t = jnp.transpose(weight_oihw, (2, 3, 1, 0)).astype(jnp.float32)  # (ky,kx,Cin,Cout)
    onehot = (jnp.arange(Wp)[None, None, :] ==
              (jnp.arange(W)[:, None, None] + jnp.arange(3)[None, :, None])
              ).astype(jnp.float32)                                     # (W, kx, Wp)
    t_mat = jnp.einsum("wxp,yxic->ypiwc", onehot, w_t).reshape(3 * Wp * Cin, WC)

    # Per-channel reduce / broadcast helpers for the (w, cout)-tiled lane layout.
    eye = jnp.eye(Cout, dtype=jnp.float32)
    rr = jnp.tile(eye, (W, 1))          # (W*Cout, Cout)
    rb = rr.T                           # (Cout, W*Cout)

    gamma2 = gamma.reshape(1, Cout).astype(jnp.float32)
    beta2 = beta.reshape(1, Cout).astype(jnp.float32)

    kernel = functools.partial(_cbr_kernel, count=N * H * W, eps=1e-5)

    # Output index_map: passes 0/1 pin the output to block (0,0) (stays VMEM-resident,
    # no writeback); pass 2 walks the real blocks -> output is written to HBM once.
    out_index = lambda p, n, t: (jnp.where(p == 2, n, 0),
                                 jnp.where(p == 2, t, 0), 0, 0)

    grid_spec = pltpu.PrefetchScalarGridSpec(
        num_scalar_prefetch=0,
        grid=(3, N, ht),
        in_specs=[
            pl.BlockSpec((None, None, th + 2, Wp * Cin), lambda p, n, t: (n, t, 0, 0)),
            pl.BlockSpec((3 * Wp * Cin, WC), lambda p, n, t: (0, 0)),
            pl.BlockSpec((1, Cout), lambda p, n, t: (0, 0)),
            pl.BlockSpec((1, Cout), lambda p, n, t: (0, 0)),
            pl.BlockSpec((WC, Cout), lambda p, n, t: (0, 0)),
            pl.BlockSpec((Cout, WC), lambda p, n, t: (0, 0)),
        ],
        out_specs=pl.BlockSpec((None, None, th, WC), out_index),
        scratch_shapes=[pltpu.VMEM((2, WC), jnp.float32),
                        pltpu.VMEM((2, WC), jnp.float32)],
    )

    out = pl.pallas_call(
        kernel,
        out_shape=jax.ShapeDtypeStruct((N, ht, th, WC), jnp.float32),
        grid_spec=grid_spec,
        compiler_params=pltpu.CompilerParams(
            # All axes "arbitrary": BN batch stats are accumulated globally in one
            # core's scratch (megacore sharding would break the reduction).
            dimension_semantics=("arbitrary", "arbitrary", "arbitrary"),
            vmem_limit_bytes=32 * 1024 * 1024),
    )(x_tiles, t_mat, gamma2, beta2, rr, rb)

    out_nhwc = out.reshape(N, H, W, Cout)
    return jnp.transpose(out_nhwc, (0, 3, 1, 2))  # back to NCHW


def _reference(x_nchw, weight_oihw, gamma, beta):
    """Pure-JAX reference matching nn.Conv2d + nn.BatchNorm2d(train) + ReLU."""
    conv = lax.conv_general_dilated(
        x_nchw, weight_oihw, window_strides=(1, 1), padding=((1, 1), (1, 1)),
        dimension_numbers=("NCHW", "OIHW", "NCHW"))
    mean = jnp.mean(conv, axis=(0, 2, 3), keepdims=True)
    var = jnp.mean((conv - mean) ** 2, axis=(0, 2, 3), keepdims=True)
    y = (conv - mean) * lax.rsqrt(var + 1e-5)
    y = y * gamma.reshape(1, -1, 1, 1) + beta.reshape(1, -1, 1, 1)
    return jnp.maximum(y, 0.0)


if __name__ == "__main__":
    # Small shapes consistent with the module: inner_nc=4 -> outer_nc=8, 16x16 images.
    N, Cin, Cout, H, W = 2, 4, 8, 16, 16

    key = jax.random.PRNGKey(0)
    kx, kw, kg, kb = jax.random.split(key, 4)
    x = jax.random.normal(kx, (N, Cin, H, W), dtype=jnp.float32)
    weight = 0.1 * jax.random.normal(kw, (Cout, Cin, 3, 3), dtype=jnp.float32)
    # Non-trivial affine params to exercise the gamma/beta path.
    gamma = 1.0 + 0.1 * jax.random.normal(kg, (Cout,), dtype=jnp.float32)
    beta = 0.1 * jax.random.normal(kb, (Cout,), dtype=jnp.float32)

    out = jax.jit(conv_batch_relu)(x, weight, gamma, beta)
    out = jax.block_until_ready(out)

    ref = _reference(x, weight, gamma, beta)
    assert out.shape == (N, Cout, H, W)
    assert jnp.allclose(out, ref, atol=1e-4, rtol=1e-4), "mismatch vs reference"

    print("KERNEL_OK")
</pallas_src>

<mosaic_0001>
module attributes {stable_mosaic.version = 11 : i64} {
  func.func @_cbr_kernel(%arg0: i32, %arg1: i32, %arg2: i32, %arg3: memref<1x1x10x72xf32, #tpu.memory_space<vmem>>, %arg4: memref<216x128xf32, #tpu.memory_space<vmem>>, %arg5: memref<1x8xf32, #tpu.memory_space<vmem>>, %arg6: memref<1x8xf32, #tpu.memory_space<vmem>>, %arg7: memref<128x8xf32, #tpu.memory_space<vmem>>, %arg8: memref<8x128xf32, #tpu.memory_space<vmem>>, %arg9: memref<1x1x8x128xf32, #tpu.memory_space<vmem>>, %arg10: memref<2x128xf32, #tpu.memory_space<vmem>>, %arg11: memref<2x128xf32, #tpu.memory_space<vmem>>) attributes {dimension_semantics = [#tpu.dimension_semantics<arbitrary>, #tpu.dimension_semantics<arbitrary>, #tpu.dimension_semantics<arbitrary>], iteration_bounds = array<i64: 3, 2, 2>, scalar_prefetch = 0 : i64, scratch_operands = 2 : i64, tpu.core_type = #tpu.core_type<tc>, window_params = [{transform_indices = @transform_0, window_bounds = array<i64: 1, 1, 10, 72>}, {pipeline_mode = #tpu.pipeline_mode<synchronous>, transform_indices = @transform_1, window_bounds = array<i64: 216, 128>}, {pipeline_mode = #tpu.pipeline_mode<synchronous>, transform_indices = @transform_2, window_bounds = array<i64: 1, 8>}, {pipeline_mode = #tpu.pipeline_mode<synchronous>, transform_indices = @transform_3, window_bounds = array<i64: 1, 8>}, {pipeline_mode = #tpu.pipeline_mode<synchronous>, transform_indices = @transform_4, window_bounds = array<i64: 128, 8>}, {pipeline_mode = #tpu.pipeline_mode<synchronous>, transform_indices = @transform_5, window_bounds = array<i64: 8, 128>}, {transform_indices = @transform_6, window_bounds = array<i64: 1, 1, 8, 128>}]} {
    %c0_i32 = arith.constant 0 : i32
    %0 = arith.cmpi eq, %arg1, %c0_i32 : i32
    %c0_i32_0 = arith.constant 0 : i32
    %1 = arith.cmpi eq, %arg2, %c0_i32_0 : i32
    %2 = arith.andi %0, %1 : i1
    %c1_i32 = arith.constant 1 : i32
    %3 = arith.cmpi eq, %arg1, %c1_i32 : i32
    %c1_i32_1 = arith.constant 1 : i32
    %4 = arith.cmpi eq, %arg2, %c1_i32_1 : i32
    %5 = arith.andi %3, %4 : i1
    %c0 = arith.constant 0 : index
    %c0_2 = arith.constant 0 : index
    %c0_3 = arith.constant 0 : index
    %c0_4 = arith.constant 0 : index
    %6 = vector.load %arg3[%c0, %c0_2, %c0_3, %c0_4] : memref<1x1x10x72xf32, #tpu.memory_space<vmem>>, vector<1x1x10x72xf32>
    %7 = vector.shape_cast %6 : vector<1x1x10x72xf32> to vector<10x72xf32>
    %8 = vector.extract_strided_slice %7 {offsets = [0, 0], sizes = [8, 72], strides = [1, 1]} : vector<10x72xf32> to vector<8x72xf32>
    %9 = vector.extract_strided_slice %7 {offsets = [1, 0], sizes = [8, 72], strides = [1, 1]} : vector<10x72xf32> to vector<8x72xf32>
    %10 = vector.extract_strided_slice %7 {offsets = [2, 0], sizes = [8, 72], strides = [1, 1]} : vector<10x72xf32> to vector<8x72xf32>
    %11 = tpu.concatenate %8, %9, %10 in 1 : vector<8x72xf32>, vector<8x72xf32>, vector<8x72xf32> -> vector<8x216xf32>
    %c0_5 = arith.constant 0 : index
    %c0_6 = arith.constant 0 : index
    %12 = vector.load %arg4[%c0_5, %c0_6] : memref<216x128xf32, #tpu.memory_space<vmem>>, vector<216x128xf32>
    %cst = arith.constant dense<0.000000e+00> : vector<8x128xf32>
    %13 = tpu.matmul %11, %12, %cst {dimension_numbers = #tpu.dot_dimension_numbers<[1], [0], [0], [1], [0, 0, 1, 1], [], []>} : vector<8x216xf32>, vector<216x128xf32>, vector<8x128xf32> -> vector<8x128xf32>
    %c0_i32_7 = arith.constant 0 : i32
    %14 = arith.cmpi eq, %arg0, %c0_i32_7 : i32
    %15 = arith.andi %14, %2 : i1
    %16 = arith.extui %15 : i1 to i32
    %c0_i32_8 = arith.constant 0 : i32
    %17 = arith.cmpi ne, %16, %c0_i32_8 : i32
    scf.if %17 {
      %cst_18 = arith.constant 0.000000e+00 : f32
      %35 = vector.broadcast %cst_18 : f32 to vector<2x128xf32>
      %c0_19 = arith.constant 0 : index
      %c0_20 = arith.constant 0 : index
      %36 = vector.load %arg10[%c0_19, %c0_20] : memref<2x128xf32, #tpu.memory_space<vmem>>, vector<2x128xf32>
      tpu.vector_store %arg10[%c0_19, %c0_20], %35 {strides = array<i32>} : memref<2x128xf32, #tpu.memory_space<vmem>>, vector<2x128xf32>,
    } else {
    }
    %c0_i32_9 = arith.constant 0 : i32
    %18 = arith.cmpi eq, %arg0, %c0_i32_9 : i32
    %19 = arith.extui %18 : i1 to i32
    %c0_i32_10 = arith.constant 0 : i32
    %20 = arith.cmpi ne, %19, %c0_i32_10 : i32
    scf.if %20 {
      %c0_18 = arith.constant 0 : index
      %c0_19 = arith.constant 0 : index
      %35 = vector.load %arg10[%c0_18, %c0_19] : memref<2x128xf32, #tpu.memory_space<vmem>>, vector<1x128xf32>
      %cst_20 = arith.constant dense<0.000000e+00> : vector<128xf32>
      %36 = vector.multi_reduction <add>, %13, %cst_20 [0] : vector<8x128xf32> to vector<128xf32>
      %37 = vector.shape_cast %36 : vector<128xf32> to vector<1x128xf32>
      %38 = arith.addf %35, %37 : vector<1x128xf32>
      %c0_21 = arith.constant 0 : index
      %c0_22 = arith.constant 0 : index
      %39 = vector.load %arg10[%c0_21, %c0_22] : memref<2x128xf32, #tpu.memory_space<vmem>>, vector<1x128xf32>
      tpu.vector_store %arg10[%c0_21, %c0_22], %38 {strides = array<i32>} : memref<2x128xf32, #tpu.memory_space<vmem>>, vector<1x128xf32>,
    } else {
    }
    %c0_i32_11 = arith.constant 0 : i32
    %21 = arith.cmpi eq, %arg0, %c0_i32_11 : i32
    %22 = arith.andi %21, %5 : i1
    %23 = arith.extui %22 : i1 to i32
    %c0_i32_12 = arith.constant 0 : i32
    %24 = arith.cmpi ne, %23, %c0_i32_12 : i32
    scf.if %24 {
      %c0_18 = arith.constant 0 : index
      %c0_19 = arith.constant 0 : index
      %35 = vector.load %arg10[%c0_18, %c0_19] : memref<2x128xf32, #tpu.memory_space<vmem>>, vector<1x128xf32>
      %c0_20 = arith.constant 0 : index
      %c0_21 = arith.constant 0 : index
      %36 = vector.load %arg7[%c0_20, %c0_21] : memref<128x8xf32, #tpu.memory_space<vmem>>, vector<128x8xf32>
      %cst_22 = arith.constant dense<0.000000e+00> : vector<1x8xf32>
      %37 = tpu.matmul %35, %36, %cst_22 {dimension_numbers = #tpu.dot_dimension_numbers<[1], [0], [0], [1], [0, 0, 1, 1], [], []>} : vector<1x128xf32>, vector<128x8xf32>, vector<1x8xf32> -> vector<1x8xf32>
      %cst_23 = arith.constant 5.120000e+02 : f32
      %38 = vector.broadcast %cst_23 : f32 to vector<1x8xf32>
      %39 = arith.divf %37, %38 : vector<1x8xf32>
      %c0_24 = arith.constant 0 : index
      %c0_25 = arith.constant 0 : index
      %40 = vector.load %arg8[%c0_24, %c0_25] : memref<8x128xf32, #tpu.memory_space<vmem>>, vector<8x128xf32>
      %cst_26 = arith.constant dense<0.000000e+00> : vector<1x128xf32>
      %41 = tpu.matmul %39, %40, %cst_26 {dimension_numbers = #tpu.dot_dimension_numbers<[1], [0], [0], [1], [0, 0, 1, 1], [], []>} : vector<1x8xf32>, vector<8x128xf32>, vector<1x128xf32> -> vector<1x128xf32>
      %c0_27 = arith.constant 0 : index
      %c0_28 = arith.constant 0 : index
      %42 = vector.load %arg11[%c0_27, %c0_28] : memref<2x128xf32, #tpu.memory_space<vmem>>, vector<1x128xf32>
      tpu.vector_store %arg11[%c0_27, %c0_28], %41 {strides = array<i32>} : memref<2x128xf32, #tpu.memory_space<vmem>>, vector<1x128xf32>,
    } else {
    }
    %c1_i32_13 = arith.constant 1 : i32
    %25 = arith.cmpi eq, %arg0, %c1_i32_13 : i32
    %26 = arith.extui %25 : i1 to i32
    %c0_i32_14 = arith.constant 0 : i32
    %27 = arith.cmpi ne, %26, %c0_i32_14 : i32
    scf.if %27 {
      %c0_18 = arith.constant 0 : index
      %c0_19 = arith.constant 0 : index
      %35 = vector.load %arg11[%c0_18, %c0_19] : memref<2x128xf32, #tpu.memory_space<vmem>>, vector<1x128xf32>
      %36 = vector.broadcast %35 : vector<1x128xf32> to vector<8x128xf32>
      %37 = arith.subf %13, %36 : vector<8x128xf32>
      %c1 = arith.constant 1 : index
      %c0_20 = arith.constant 0 : index
      %38 = vector.load %arg10[%c1, %c0_20] : memref<2x128xf32, #tpu.memory_space<vmem>>, vector<1x128xf32>
      %39 = arith.mulf %37, %37 : vector<8x128xf32>
      %cst_21 = arith.constant dense<0.000000e+00> : vector<128xf32>
      %40 = vector.multi_reduction <add>, %39, %cst_21 [0] : vector<8x128xf32> to vector<128xf32>
      %41 = vector.shape_cast %40 : vector<128xf32> to vector<1x128xf32>
      %42 = arith.addf %38, %41 : vector<1x128xf32>
      %c1_22 = arith.constant 1 : index
      %c0_23 = arith.constant 0 : index
      %43 = vector.load %arg10[%c1_22, %c0_23] : memref<2x128xf32, #tpu.memory_space<vmem>>, vector<1x128xf32>
      tpu.vector_store %arg10[%c1_22, %c0_23], %42 {strides = array<i32>} : memref<2x128xf32, #tpu.memory_space<vmem>>, vector<1x128xf32>,
    } else {
    }
    %c1_i32_15 = arith.constant 1 : i32
    %28 = arith.cmpi eq, %arg0, %c1_i32_15 : i32
    %29 = arith.andi %28, %5 : i1
    %30 = arith.extui %29 : i1 to i32
    %c0_i32_16 = arith.constant 0 : i32
    %31 = arith.cmpi ne, %30, %c0_i32_16 : i32
    scf.if %31 {
      %c1 = arith.constant 1 : index
      %c0_18 = arith.constant 0 : index
      %35 = vector.load %arg10[%c1, %c0_18] : memref<2x128xf32, #tpu.memory_space<vmem>>, vector<1x128xf32>
      %c0_19 = arith.constant 0 : index
      %c0_20 = arith.constant 0 : index
      %36 = vector.load %arg7[%c0_19, %c0_20] : memref<128x8xf32, #tpu.memory_space<vmem>>, vector<128x8xf32>
      %cst_21 = arith.constant dense<0.000000e+00> : vector<1x8xf32>
      %37 = tpu.matmul %35, %36, %cst_21 {dimension_numbers = #tpu.dot_dimension_numbers<[1], [0], [0], [1], [0, 0, 1, 1], [], []>} : vector<1x128xf32>, vector<128x8xf32>, vector<1x8xf32> -> vector<1x8xf32>
      %cst_22 = arith.constant 5.120000e+02 : f32
      %38 = vector.broadcast %cst_22 : f32 to vector<1x8xf32>
      %39 = arith.divf %37, %38 : vector<1x8xf32>
      %c0_23 = arith.constant 0 : index
      %c0_24 = arith.constant 0 : index
      %40 = vector.load %arg10[%c0_23, %c0_24] : memref<2x128xf32, #tpu.memory_space<vmem>>, vector<1x128xf32>
      %c0_25 = arith.constant 0 : index
      %c0_26 = arith.constant 0 : index
      %41 = vector.load %arg7[%c0_25, %c0_26] : memref<128x8xf32, #tpu.memory_space<vmem>>, vector<128x8xf32>
      %cst_27 = arith.constant dense<0.000000e+00> : vector<1x8xf32>
      %42 = tpu.matmul %40, %41, %cst_27 {dimension_numbers = #tpu.dot_dimension_numbers<[1], [0], [0], [1], [0, 0, 1, 1], [], []>} : vector<1x128xf32>, vector<128x8xf32>, vector<1x8xf32> -> vector<1x8xf32>
      %cst_28 = arith.constant 5.120000e+02 : f32
      %43 = vector.broadcast %cst_28 : f32 to vector<1x8xf32>
      %44 = arith.divf %42, %43 : vector<1x8xf32>
      %cst_29 = arith.constant 9.99999974E-6 : f32
      %45 = vector.broadcast %cst_29 : f32 to vector<1x8xf32>
      %46 = arith.addf %39, %45 : vector<1x8xf32>
      %47 = math.rsqrt %46 : vector<1x8xf32>
      %c0_30 = arith.constant 0 : index
      %c0_31 = arith.constant 0 : index
      %48 = vector.load %arg5[%c0_30, %c0_31] : memref<1x8xf32, #tpu.memory_space<vmem>>, vector<1x8xf32>
      %49 = arith.mulf %48, %47 : vector<1x8xf32>
      %c0_32 = arith.constant 0 : index
      %c0_33 = arith.constant 0 : index
      %50 = vector.load %arg6[%c0_32, %c0_33] : memref<1x8xf32, #tpu.memory_space<vmem>>, vector<1x8xf32>
      %51 = arith.mulf %44, %49 : vector<1x8xf32>
      %52 = arith.subf %50, %51 : vector<1x8xf32>
      %c0_34 = arith.constant 0 : index
      %c0_35 = arith.constant 0 : index
      %53 = vector.load %arg8[%c0_34, %c0_35] : memref<8x128xf32, #tpu.memory_space<vmem>>, vector<8x128xf32>
      %cst_36 = arith.constant dense<0.000000e+00> : vector<1x128xf32>
      %54 = tpu.matmul %49, %53, %cst_36 {dimension_numbers = #tpu.dot_dimension_numbers<[1], [0], [0], [1], [0, 0, 1, 1], [], []>} : vector<1x8xf32>, vector<8x128xf32>, vector<1x128xf32> -> vector<1x128xf32>
      %c0_37 = arith.constant 0 : index
      %c0_38 = arith.constant 0 : index
      %55 = vector.load %arg11[%c0_37, %c0_38] : memref<2x128xf32, #tpu.memory_space<vmem>>, vector<1x128xf32>
      tpu.vector_store %arg11[%c0_37, %c0_38], %54 {strides = array<i32>} : memref<2x128xf32, #tpu.memory_space<vmem>>, vector<1x128xf32>,
      %c0_39 = arith.constant 0 : index
      %c0_40 = arith.constant 0 : index
      %56 = vector.load %arg8[%c0_39, %c0_40] : memref<8x128xf32, #tpu.memory_space<vmem>>, vector<8x128xf32>
      %cst_41 = arith.constant dense<0.000000e+00> : vector<1x128xf32>
      %57 = tpu.matmul %52, %56, %cst_41 {dimension_numbers = #tpu.dot_dimension_numbers<[1], [0], [0], [1], [0, 0, 1, 1], [], []>} : vector<1x8xf32>, vector<8x128xf32>, vector<1x128xf32> -> vector<1x128xf32>
      %c1_42 = arith.constant 1 : index
      %c0_43 = arith.constant 0 : index
      %58 = vector.load %arg11[%c1_42, %c0_43] : memref<2x128xf32, #tpu.memory_space<vmem>>, vector<1x128xf32>
      tpu.vector_store %arg11[%c1_42, %c0_43], %57 {strides = array<i32>} : memref<2x128xf32, #tpu.memory_space<vmem>>, vector<1x128xf32>,
    } else {
    }
    %c2_i32 = arith.constant 2 : i32
    %32 = arith.cmpi eq, %arg0, %c2_i32 : i32
    %33 = arith.extui %32 : i1 to i32
    %c0_i32_17 = arith.constant 0 : i32
    %34 = arith.cmpi ne, %33, %c0_i32_17 : i32
    scf.if %34 {
      %c0_18 = arith.constant 0 : index
      %c0_19 = arith.constant 0 : index
      %35 = vector.load %arg11[%c0_18, %c0_19] : memref<2x128xf32, #tpu.memory_space<vmem>>, vector<1x128xf32>
      %36 = vector.broadcast %35 : vector<1x128xf32> to vector<8x128xf32>
      %37 = arith.mulf %13, %36 : vector<8x128xf32>
      %c1 = arith.constant 1 : index
      %c0_20 = arith.constant 0 : index
      %38 = vector.load %arg11[%c1, %c0_20] : memref<2x128xf32, #tpu.memory_space<vmem>>, vector<1x128xf32>
      %39 = vector.broadcast %38 : vector<1x128xf32> to vector<8x128xf32>
      %40 = arith.addf %37, %39 : vector<8x128xf32>
      %cst_21 = arith.constant 0.000000e+00 : f32
      %41 = vector.broadcast %cst_21 : f32 to vector<8x128xf32>
      %42 = arith.maximumf %40, %41 : vector<8x128xf32>
      %c0_22 = arith.constant 0 : index
      %c0_23 = arith.constant 0 : index
      %c0_24 = arith.constant 0 : index
      %c0_25 = arith.constant 0 : index
      %43 = vector.load %arg9[%c0_22, %c0_23, %c0_24, %c0_25] : memref<1x1x8x128xf32, #tpu.memory_space<vmem>>, vector<1x1x8x128xf32>
      %44 = vector.shape_cast %43 : vector<1x1x8x128xf32> to vector<8x128xf32>
      %45 = vector.shape_cast %42 : vector<8x128xf32> to vector<1x1x8x128xf32>
      tpu.vector_store %arg9[%c0_22, %c0_23, %c0_24, %c0_25], %45 {strides = array<i32>} : memref<1x1x8x128xf32, #tpu.memory_space<vmem>>, vector<1x1x8x128xf32>,
    } else {
    }
    return
  }
  func.func @transform_0(%arg0: i32, %arg1: i32, %arg2: i32) -> (i32, i32, i32, i32) {
    %c0_i32 = arith.constant 0 : i32
    %c0_i32_0 = arith.constant 0 : i32
    %c0_i32_1 = arith.constant 0 : i32
    return %arg1, %arg2, %c0_i32, %c0_i32_0 : i32, i32, i32, i32
  }
  func.func @transform_1(%arg0: i32, %arg1: i32, %arg2: i32) -> (i32, i32) {
    %c0_i32 = arith.constant 0 : i32
    %c0_i32_0 = arith.constant 0 : i32
    %c0_i32_1 = arith.constant 0 : i32
    return %c0_i32, %c0_i32_0 : i32, i32
  }
  func.func @transform_2(%arg0: i32, %arg1: i32, %arg2: i32) -> (i32, i32) {
    %c0_i32 = arith.constant 0 : i32
    %c0_i32_0 = arith.constant 0 : i32
    %c0_i32_1 = arith.constant 0 : i32
    return %c0_i32, %c0_i32_0 : i32, i32
  }
  func.func @transform_3(%arg0: i32, %arg1: i32, %arg2: i32) -> (i32, i32) {
    %c0_i32 = arith.constant 0 : i32
    %c0_i32_0 = arith.constant 0 : i32
    %c0_i32_1 = arith.constant 0 : i32
    return %c0_i32, %c0_i32_0 : i32, i32
  }
  func.func @transform_4(%arg0: i32, %arg1: i32, %arg2: i32) -> (i32, i32) {
    %c0_i32 = arith.constant 0 : i32
    %c0_i32_0 = arith.constant 0 : i32
    %c0_i32_1 = arith.constant 0 : i32
    return %c0_i32, %c0_i32_0 : i32, i32
  }
  func.func @transform_5(%arg0: i32, %arg1: i32, %arg2: i32) -> (i32, i32) {
    %c0_i32 = arith.constant 0 : i32
    %c0_i32_0 = arith.constant 0 : i32
    %c0_i32_1 = arith.constant 0 : i32
    return %c0_i32, %c0_i32_0 : i32, i32
  }
  func.func @transform_6(%arg0: i32, %arg1: i32, %arg2: i32) -> (i32, i32, i32, i32) {
    %c2_i32 = arith.constant 2 : i32
    %0 = arith.cmpi eq, %arg0, %c2_i32 : i32
    %c0_i32 = arith.constant 0 : i32
    %1 = arith.select %0, %arg1, %c0_i32 : i32
    %c2_i32_0 = arith.constant 2 : i32
    %2 = arith.cmpi eq, %arg0, %c2_i32_0 : i32
    %c0_i32_1 = arith.constant 0 : i32
    %3 = arith.select %2, %arg2, %c0_i32_1 : i32
    %c0_i32_2 = arith.constant 0 : i32
    %c0_i32_3 = arith.constant 0 : i32
    %c0_i32_4 = arith.constant 0 : i32
    return %1, %3, %c0_i32_2, %c0_i32_3 : i32, i32, i32, i32
  }
}

</mosaic_0001>

<llo_original>
// kernel: tile.9
$region0: #{tile.9}
  %s0 = inlined_call_operand.vmem [shape: f32[16,8,8], index: 0, kind: input, shape index: {}]
  %s1 = inlined_call_operand.vmem [shape: f32[128,8], index: 1, kind: output, shape index: {}]
  %s2 = smov 3
  %v3 = vld [vmem:[%s0] ss:$16 sm:%s2]
  %s4 = smov 12
  %v5 = vld [vmem:[%s0] ss:$16 sm:%s4]
  %vm6 = vcmask 1043458
  %v7 = vsel %vm6, %v5, %v3
  %s8 = smov 48
  %v9 = vld [vmem:[%s0] ss:$16 sm:%s8]
  %vm10 = vcmask 1045508
  %v11 = vsel %vm10, %v9, %v7
  %s12 = smov 192
  %v13 = vld [vmem:[%s0] ss:$16 sm:%s12]
  %vm14 = vcmask 1047558
  %v15 = vsel %vm14, %v13, %v11
  %vm16 = vcmask 64512
  %17 = vst.msk [vmem:[%s1] sm:$0xff] %vm16, %v15
  %s18 = scalar_lea.vmem %s0, 15
  %s19 = smov 3
  %v20 = vld [vmem:[%s18] ss:$16 sm:%s19]
  %s21 = scalar_lea.vmem %s0, 15
  %s22 = smov 12
  %v23 = vld [vmem:[%s21] ss:$16 sm:%s22]
  %vm24 = vcmask 1043458
  %v25 = vsel %vm24, %v23, %v20
  %s26 = scalar_lea.vmem %s0, 15
  %s27 = smov 48
  %v28 = vld [vmem:[%s26] ss:$16 sm:%s27]
  %vm29 = vcmask 1045508
  %v30 = vsel %vm29, %v28, %v25
  %s31 = scalar_lea.vmem %s0, 15
  %s32 = smov 192
  %v33 = vld [vmem:[%s31] ss:$16 sm:%s32]
  %vm34 = vcmask 1047558
  %v35 = vsel %vm34, %v33, %v30
  %36 = vrot.lane.b32.xlu0 %v35, 120
  %v37 = vpop.permute.xlu0 %36
  %vm38 = vcmask 1048512
  %39 = vst.msk [vmem:[%s1] sm:$0xff] %vm38, %v37
  %s40 = scalar_lea.vmem %s0, 14
  %s41 = smov 3
  %v42 = vld [vmem:[%s40] ss:$16 sm:%s41]
  %s43 = scalar_lea.vmem %s0, 14
  %s44 = smov 12
  %v45 = vld [vmem:[%s43] ss:$16 sm:%s44]
  %vm46 = vcmask 1043458
  %v47 = vsel %vm46, %v45, %v42
  %s48 = scalar_lea.vmem %s0, 14
  %s49 = smov 48
  %v50 = vld [vmem:[%s48] ss:$16 sm:%s49]
  %vm51 = vcmask 1045508
  %v52 = vsel %vm51, %v50, %v47
  %s53 = scalar_lea.vmem %s0, 14
  %s54 = smov 192
  %v55 = vld [vmem:[%s53] ss:$16 sm:%s54]
  %vm56 = vcmask 1047558
  %v57 = vsel %vm56, %v55, %v52
  %58 = vrot.lane.b32.xlu0 %v57, 112
  %v59 = vpop.permute.xlu0 %58
  %vm60 = vcmask 982912
  %61 = vst.msk [vmem:[%s1] sm:$0xff] %vm60, %v59
  %s62 = scalar_lea.vmem %s0, 13
  %s63 = smov 3
  %v64 = vld [vmem:[%s62] ss:$16 sm:%s63]
  %s65 = scalar_lea.vmem %s0, 13
  %s66 = smov 12
  %v67 = vld [vmem:[%s65] ss:$16 sm:%s66]
  %vm68 = vcmask 1043458
  %v69 = vsel %vm68, %v67, %v64
  %s70 = scalar_lea.vmem %s0, 13
  %s71 = smov 48
  %v72 = vld [vmem:[%s70] ss:$16 sm:%s71]
  %vm73 = vcmask 1045508
  %v74 = vsel %vm73, %v72, %v69
  %s75 = scalar_lea.vmem %s0, 13
  %s76 = smov 192
  %v77 = vld [vmem:[%s75] ss:$16 sm:%s76]
  %vm78 = vcmask 1047558
  %v79 = vsel %vm78, %v77, %v74
  %80 = vrot.lane.b32.xlu0 %v79, 104
  %v81 = vpop.permute.xlu0 %80
  %vm82 = vcmask 917312
  %83 = vst.msk [vmem:[%s1] sm:$0xff] %vm82, %v81
  %s84 = scalar_lea.vmem %s0, 12
  %s85 = smov 3
  %v86 = vld [vmem:[%s84] ss:$16 sm:%s85]
  %s87 = scalar_lea.vmem %s0, 12
  %s88 = smov 12
  %v89 = vld [vmem:[%s87] ss:$16 sm:%s88]
  %vm90 = vcmask 1043458
  %v91 = vsel %vm90, %v89, %v86
  %s92 = scalar_lea.vmem %s0, 12
  %s93 = smov 48
  %v94 = vld [vmem:[%s92] ss:$16 sm:%s93]
  %vm95 = vcmask 1045508
  %v96 = vsel %vm95, %v94, %v91
  %s97 = scalar_lea.vmem %s0, 12
  %s98 = smov 192
  %v99 = vld [vmem:[%s97] ss:$16 sm:%s98]
  %vm100 = vcmask 1047558
  %v101 = vsel %vm100, %v99, %v96
  %102 = vrot.lane.b32.xlu0 %v101, 96
  %v103 = vpop.permute.xlu0 %102
  %vm104 = vcmask 851712
  %105 = vst.msk [vmem:[%s1] sm:$0xff] %vm104, %v103
  %s106 = scalar_lea.vmem %s0, 11
  %s107 = smov 3
  %v108 = vld [vmem:[%s106] ss:$16 sm:%s107]
  %s109 = scalar_lea.vmem %s0, 11
  %s110 = smov 12
  %v111 = vld [vmem:[%s109] ss:$16 sm:%s110]
  %vm112 = vcmask 1043458
  %v113 = vsel %vm112, %v111, %v108
  %s114 = scalar_lea.vmem %s0, 11
  %s115 = smov 48
  %v116 = vld [vmem:[%s114] ss:$16 sm:%s115]
  %vm117 = vcmask 1045508
  %v118 = vsel %vm117, %v116, %v113
  %s119 = scalar_lea.vmem %s0, 11
  %s120 = smov 192
  %v121 = vld [vmem:[%s119] ss:$16 sm:%s120]
  %vm122 = vcmask 1047558
  %v123 = vsel %vm122, %v121, %v118
  %124 = vrot.lane.b32.xlu0 %v123, 88
  %v125 = vpop.permute.xlu0 %124
  %vm126 = vcmask 786112
  %127 = vst.msk [vmem:[%s1] sm:$0xff] %vm126, %v125
  %s128 = scalar_lea.vmem %s0, 10
  %s129 = smov 3
  %v130 = vld [vmem:[%s128] ss:$16 sm:%s129]
  %s131 = scalar_lea.vmem %s0, 10
  %s132 = smov 12
  %v133 = vld [vmem:[%s131] ss:$16 sm:%s132]
  %vm134 = vcmask 1043458
  %v135 = vsel %vm134, %v133, %v130
  %s136 = scalar_lea.vmem %s0, 10
  %s137 = smov 48
  %v138 = vld [vmem:[%s136] ss:$16 sm:%s137]
  %vm139 = vcmask 1045508
  %v140 = vsel %vm139, %v138, %v135
  %s141 = scalar_lea.vmem %s0, 10
  %s142 = smov 192
  %v143 = vld [vmem:[%s141] ss:$16 sm:%s142]
  %vm144 = vcmask 1047558
  %v145 = vsel %vm144, %v143, %v140
  %146 = vrot.lane.b32.xlu0 %v145, 80
  %v147 = vpop.permute.xlu0 %146
  %vm148 = vcmask 720512
  %149 = vst.msk [vmem:[%s1] sm:$0xff] %vm148, %v147
  %s150 = scalar_lea.vmem %s0, 9
  %s151 = smov 3
  %v152 = vld [vmem:[%s150] ss:$16 sm:%s151]
  %s153 = scalar_lea.vmem %s0, 9
  %s154 = smov 12
  %v155 = vld [vmem:[%s153] ss:$16 sm:%s154]
  %vm156 = vcmask 1043458
  %v157 = vsel %vm156, %v155, %v152
  %s158 = scalar_lea.vmem %s0, 9
  %s159 = smov 48
  %v160 = vld [vmem:[%s158] ss:$16 sm:%s159]
  %vm161 = vcmask 1045508
  %v162 = vsel %vm161, %v160, %v157
  %s163 = scalar_lea.vmem %s0, 9
  %s164 = smov 192
  %v165 = vld [vmem:[%s163] ss:$16 sm:%s164]
  %vm166 = vcmask 1047558
  %v167 = vsel %vm166, %v165, %v162
  %168 = vrot.lane.b32.xlu0 %v167, 72
  %v169 = vpop.permute.xlu0 %168
  %vm170 = vcmask 654912
  %171 = vst.msk [vmem:[%s1] sm:$0xff] %vm170, %v169
  %s172 = scalar_lea.vmem %s0, 8
  %s173 = smov 3
  %v174 = vld [vmem:[%s172] ss:$16 sm:%s173]
  %s175 = scalar_lea.vmem %s0, 8
  %s176 = smov 12
  %v177 = vld [vmem:[%s175] ss:$16 sm:%s176]
  %vm178 = vcmask 1043458
  %v179 = vsel %vm178, %v177, %v174
  %s180 = scalar_lea.vmem %s0, 8
  %s181 = smov 48
  %v182 = vld [vmem:[%s180] ss:$16 sm:%s181]
  %vm183 = vcmask 1045508
  %v184 = vsel %vm183, %v182, %v179
  %s185 = scalar_lea.vmem %s0, 8
  %s186 = smov 192
  %v187 = vld [vmem:[%s185] ss:$16 sm:%s186]
  %vm188 = vcmask 1047558
  %v189 = vsel %vm188, %v187, %v184
  %190 = vrot.lane.b32.xlu0 %v189, 64
  %v191 = vpop.permute.xlu0 %190
  %vm192 = vcmask 589312
  %193 = vst.msk [vmem:[%s1] sm:$0xff] %vm192, %v191
  %s194 = scalar_lea.vmem %s0, 7
  %s195 = smov 3
  %v196 = vld [vmem:[%s194] ss:$16 sm:%s195]
  %s197 = scalar_lea.vmem %s0, 7
  %s198 = smov 12
  %v199 = vld [vmem:[%s197] ss:$16 sm:%s198]
  %vm200 = vcmask 1043458
  %v201 = vsel %vm200, %v199, %v196
  %s202 = scalar_lea.vmem %s0, 7
  %s203 = smov 48
  %v204 = vld [vmem:[%s202] ss:$16 sm:%s203]
  %vm205 = vcmask 1045508
  %v206 = vsel %vm205, %v204, %v201
  %s207 = scalar_lea.vmem %s0, 7
  %s208 = smov 192
  %v209 = vld [vmem:[%s207] ss:$16 sm:%s208]
  %vm210 = vcmask 1047558
  %v211 = vsel %vm210, %v209, %v206
  %212 = vrot.lane.b32.xlu0 %v211, 56
  %v213 = vpop.permute.xlu0 %212
  %vm214 = vcmask 523712
  %215 = vst.msk [vmem:[%s1] sm:$0xff] %vm214, %v213
  %s216 = scalar_lea.vmem %s0, 6
  %s217 = smov 3
  %v218 = vld [vmem:[%s216] ss:$16 sm:%s217]
  %s219 = scalar_lea.vmem %s0, 6
  %s220 = smov 12
  %v221 = vld [vmem:[%s219] ss:$16 sm:%s220]
  %vm222 = vcmask 1043458
  %v223 = vsel %vm222, %v221, %v218
  %s224 = scalar_lea.vmem %s0, 6
  %s225 = smov 48
  %v226 = vld [vmem:[%s224] ss:$16 sm:%s225]
  %vm227 = vcmask 1045508
  %v228 = vsel %vm227, %v226, %v223
  %s229 = scalar_lea.vmem %s0, 6
  %s230 = smov 192
  %v231 = vld [vmem:[%s229] ss:$16 sm:%s230]
  %vm232 = vcmask 1047558
  %v233 = vsel %vm232, %v231, %v228
  %234 = vrot.lane.b32.xlu0 %v233, 48
  %v235 = vpop.permute.xlu0 %234
  %vm236 = vcmask 458112
  %237 = vst.msk [vmem:[%s1] sm:$0xff] %vm236, %v235
  %s238 = scalar_lea.vmem %s0, 5
  %s239 = smov 3
  %v240 = vld [vmem:[%s238] ss:$16 sm:%s239]
  %s241 = scalar_lea.vmem %s0, 5
  %s242 = smov 12
  %v243 = vld [vmem:[%s241] ss:$16 sm:%s242]
  %vm244 = vcmask 1043458
  %v245 = vsel %vm244, %v243, %v240
  %s246 = scalar_lea.vmem %s0, 5
  %s247 = smov 48
  %v248 = vld [vmem:[%s246] ss:$16 sm:%s247]
  %vm249 = vcmask 1045508
  %v250 = vsel %vm249, %v248, %v245
  %s251 = scalar_lea.vmem %s0, 5
  %s252 = smov 192
  %v253 = vld [vmem:[%s251] ss:$16 sm:%s252]
  %vm254 = vcmask 1047558
  %v255 = vsel %vm254, %v253, %v250
  %256 = vrot.lane.b32.xlu0 %v255, 40
  %v257 = vpop.permute.xlu0 %256
  %vm258 = vcmask 392512
  %259 = vst.msk [vmem:[%s1] sm:$0xff] %vm258, %v257
  %s260 = scalar_lea.vmem %s0, 4
  %s261 = smov 3
  %v262 = vld [vmem:[%s260] ss:$16 sm:%s261]
  %s263 = scalar_lea.vmem %s0, 4
  %s264 = smov 12
  %v265 = vld [vmem:[%s263] ss:$16 sm:%s264]
  %vm266 = vcmask 1043458
  %v267 = vsel %vm266, %v265, %v262
  %s268 = scalar_lea.vmem %s0, 4
  %s269 = smov 48
  %v270 = vld [vmem:[%s268] ss:$16 sm:%s269]
  %vm271 = vcmask 1045508
  %v272 = vsel %vm271, %v270, %v267
  %s273 = scalar_lea.vmem %s0, 4
  %s274 = smov 192
  %v275 = vld [vmem:[%s273] ss:$16 sm:%s274]
  %vm276 = vcmask 1047558
  %v277 = vsel %vm276, %v275, %v272
  %278 = vrot.lane.b32.xlu0 %v277, 32
  %v279 = vpop.permute.xlu0 %278
  %vm280 = vcmask 326912
  %281 = vst.msk [vmem:[%s1] sm:$0xff] %vm280, %v279
  %s282 = scalar_lea.vmem %s0, 3
  %s283 = smov 3
  %v284 = vld [vmem:[%s282] ss:$16 sm:%s283]
  %s285 = scalar_lea.vmem %s0, 3
  %s286 = smov 12
  %v287 = vld [vmem:[%s285] ss:$16 sm:%s286]
  %vm288 = vcmask 1043458
  %v289 = vsel %vm288, %v287, %v284
  %s290 = scalar_lea.vmem %s0, 3
  %s291 = smov 48
  %v292 = vld [vmem:[%s290] ss:$16 sm:%s291]
  %vm293 = vcmask 1045508
  %v294 = vsel %vm293, %v292, %v289
  %s295 = scalar_lea.vmem %s0, 3
  %s296 = smov 192
  %v297 = vld [vmem:[%s295] ss:$16 sm:%s296]
  %vm298 = vcmask 1047558
  %v299 = vsel %vm298, %v297, %v294
  %300 = vrot.lane.b32.xlu0 %v299, 24
  %v301 = vpop.permute.xlu0 %300
  %vm302 = vcmask 261312
  %303 = vst.msk [vmem:[%s1] sm:$0xff] %vm302, %v301
  %s304 = scalar_lea.vmem %s0, 2
  %s305 = smov 3
  %v306 = vld [vmem:[%s304] ss:$16 sm:%s305]
  %s307 = scalar_lea.vmem %s0, 2
  %s308 = smov 12
  %v309 = vld [vmem:[%s307] ss:$16 sm:%s308]
  %vm310 = vcmask 1043458
  %v311 = vsel %vm310, %v309, %v306
  %s312 = scalar_lea.vmem %s0, 2
  %s313 = smov 48
  %v314 = vld [vmem:[%s312] ss:$16 sm:%s313]
  %vm315 = vcmask 1045508
  %v316 = vsel %vm315, %v314, %v311
  %s317 = scalar_lea.vmem %s0, 2
  %s318 = smov 192
  %v319 = vld [vmem:[%s317] ss:$16 sm:%s318]
  %vm320 = vcmask 1047558
  %v321 = vsel %vm320, %v319, %v316
  %322 = vrot.lane.b32.xlu0 %v321, 16
  %v323 = vpop.permute.xlu0 %322
  %vm324 = vcmask 195712
  %325 = vst.msk [vmem:[%s1] sm:$0xff] %vm324, %v323
  %s326 = scalar_lea.vmem %s0, 1
  %s327 = smov 3
  %v328 = vld [vmem:[%s326] ss:$16 sm:%s327]
  %s329 = scalar_lea.vmem %s0, 1
  %s330 = smov 12
  %v331 = vld [vmem:[%s329] ss:$16 sm:%s330]
  %vm332 = vcmask 1043458
  %v333 = vsel %vm332, %v331, %v328
  %s334 = scalar_lea.vmem %s0, 1
  %s335 = smov 48
  %v336 = vld [vmem:[%s334] ss:$16 sm:%s335]
  %vm337 = vcmask 1045508
  %v338 = vsel %vm337, %v336, %v333
  %s339 = scalar_lea.vmem %s0, 1
  %s340 = smov 192
  %v341 = vld [vmem:[%s339] ss:$16 sm:%s340]
  %vm342 = vcmask 1047558
  %v343 = vsel %vm342, %v341, %v338
  %344 = vrot.lane.b32.xlu0 %v343, 8
  %v345 = vpop.permute.xlu0 %344
  %vm346 = vcmask 130112
  %347 = vst.msk [vmem:[%s1] sm:$0xff] %vm346, %v345

// kernel: conv_batch_relu.1
$region0: #{conv_batch_relu.1}
  #allocation0 [shape = 'u32[]', space=smem, size = 0x4, offset = 0x4, fixed_abs, tag = 'smem constant byte address 0x4 - core index']
  #allocation1 [shape = 'u32[72,128]{1,0:T(1,128)}', space=vmem, size = 0x9000, scoped, tag = 'internal scratch']
  #allocation2 [shape = 'f32[2,128]{1,0:T(2,128)}', space=vmem, size = 0x400, scoped, tag = 'scratch operand']
  #allocation3 [shape = 'f32[2,128]{1,0:T(2,128)}', space=vmem, size = 0x400, scoped, tag = 'scratch operand']
  %s0 = inlined_call_operand.vmem [shape: f32[2,2,10,72], index: 0, kind: input, shape index: {}]
  %s1 = inlined_call_operand.vmem [shape: f32[216,128], index: 1, kind: input, shape index: {}]
  %s2 = inlined_call_operand.vmem [shape: f32[1,8], index: 2, kind: input, shape index: {}]
  %s3 = inlined_call_operand.vmem [shape: f32[1,8], index: 3, kind: input, shape index: {}]
  %s4 = inlined_call_operand.vmem [shape: f32[128,8], index: 4, kind: input, shape index: {}]
  %s5 = inlined_call_operand.vmem [shape: f32[8,128], index: 5, kind: input, shape index: {}]
  %s6 = inlined_call_operand.vmem [shape: f32[2,2,8,128], index: 6, kind: output, shape index: {}]
  %s7 = sld [smem:[#allocation0]]
  $region81: #{conv_batch_relu.1} parent=0
    _
  %s9 = ssub.s32 1, %s7
  %s10 = scalar_select 0, %s9, %s7
  loop: start=0, step=1, limit=14
  $region2: #{conv_batch_relu.1} parent=0 // loop_pre_header
    _
  $region3: #{conv_batch_relu.1} parent=0 // loop_header
    %s12 = sphi 0, %s16
    %p13 = scmp.ge.s32.totalorder %s12, 14
    %s19 = sphi 0, %s38
    %s20 = sphi 0, %s34
    %s21 = sphi 0, %s30
    %s22 = sphi 0, %s19
    %s23 = sphi 0, %s20
    %s24 = sphi 0, %s21
    %s25 = sphi 0, %s22
    %s26 = sphi 0, %s23
    %s27 = sphi 0, %s24
    %s43 = sphi 0, %s45
    %s46 = sphi 0, %s43
    %s47 = sphi 0, %s46
    %s63 = sphi 0, %s47
    %s67 = sphi 0, %s67
    %s69 = sphi 0, %s67
    %s70 = sphi 0, %s69
    %s84 = sphi 0, %s70
    %s88 = sphi 0, %s88
    %s90 = sphi 0, %s88
    %s91 = sphi 0, %s90
    %s105 = sphi 0, %s91
    %s109 = sphi 0, %s109
    %s111 = sphi 0, %s109
    %s112 = sphi 0, %s111
    %s126 = sphi 0, %s112
    %s130 = sphi 0, %s130
    %s132 = sphi 0, %s130
    %s133 = sphi 0, %s132
    %s147 = sphi 0, %s133
    %s151 = sphi 0, %s151
    %s153 = sphi 0, %s151
    %s154 = sphi 0, %s153
    %s168 = sphi 0, %s154
    %s182 = sphi 0, %s184
    %s185 = sphi 0, %s182
    %s186 = sphi 0, %s185
    %s202 = sphi 0, %s186
  $region4: #{conv_batch_relu.1} parent=0 // loop_header_branch
    %15 = sbr.rel (%p13) target = $region8
  $region5: #{conv_batch_relu.1} parent=0 // loop_body
    %s17 = ssub.s32 %s12, 1
    %s18 = ssub.s32 %s12, 2
    %s28 = sadd.s32 1, %s21
    %p29 = scmp.ge.s32.totalorder %s28, 2
    %s30 = scalar_select %p29, 0, %s28
    %s31 = sadd.s32 1, %s20
    %s32 = scalar_select %p29, %s31, %s20
    %p33 = scmp.ge.s32.totalorder %s32, 2
    %s34 = scalar_select %p33, 0, %s32
    %s35 = sadd.s32 1, %s19
    %s36 = scalar_select %p33, %s35, %s19
    %p37 = scmp.ge.s32.totalorder %s36, 3
    %s38 = scalar_select %p37, 0, %s36
    %s39 = ssub.s32 %s20, %s34
    %s40 = ssub.s32 %s21, %s30
    %s41 = sor.u32 %s39, %s40
    %p42 = scmp.eq.s32.totalorder %s41, 0
    %s44 = sadd.s32 %s43, 1
    %s45 = scalar_select %p42, %s43, %s44
    %p48 = pneg %p42
    %p49 = scmp.eq.s32.totalorder %s12, 11
    %p50 = por %p48, %p49
    %p51 = scmp.ne.s32.totalorder %s43, %s46
    %p52 = scmp.eq.s32.totalorder %s12, 0
    %p53 = por %p51, %p52
    %p54 = scmp.ne.s32.totalorder %s43, %s46
    %p55 = scmp.eq.s32.totalorder %s17, 11
    %p56 = por %p54, %p55
    %p57 = scmp.ne.s32.totalorder %s46, %s47
    %p58 = scmp.eq.s32.totalorder %s17, 0
    %p59 = por %p57, %p58
    %p60 = scmp.ne.s32.totalorder %s46, %s47
    %p61 = scmp.eq.s32.totalorder %s18, 11
    %p62 = por %p60, %p61
    %p64 = scmp.ne.s32.totalorder %s47, %s63
    %p65 = scmp.eq.s32.totalorder %s18, 0
    %p66 = por %p64, %p65
    %s68 = sadd.s32 %s67, 1
    %p71 = scmp.eq.s32.totalorder %s12, 11
    %p72 = scmp.ne.s32.totalorder %s67, %s69
    %p73 = scmp.eq.s32.totalorder %s12, 0
    %p74 = por %p72, %p73
    %p75 = scmp.ne.s32.totalorder %s67, %s69
    %p76 = scmp.eq.s32.totalorder %s17, 11
    %p77 = por %p75, %p76
    %p78 = scmp.ne.s32.totalorder %s69, %s70
    %p79 = scmp.eq.s32.totalorder %s17, 0
    %p80 = por %p78, %p79
    %p81 = scmp.ne.s32.totalorder %s69, %s70
    %p82 = scmp.eq.s32.totalorder %s18, 11
    %p83 = por %p81, %p82
    %p85 = scmp.ne.s32.totalorder %s70, %s84
    %p86 = scmp.eq.s32.totalorder %s18, 0
    %p87 = por %p85, %p86
    %s89 = sadd.s32 %s88, 1
    %p92 = scmp.eq.s32.totalorder %s12, 11
    %p93 = scmp.ne.s32.totalorder %s88, %s90
    %p94 = scmp.eq.s32.totalorder %s12, 0
    %p95 = por %p93, %p94
    %p96 = scmp.ne.s32.totalorder %s88, %s90
    %p97 = scmp.eq.s32.totalorder %s17, 11
    %p98 = por %p96, %p97
    %p99 = scmp.ne.s32.totalorder %s90, %s91
    %p100 = scmp.eq.s32.totalorder %s17, 0
    %p101 = por %p99, %p100
    %p102 = scmp.ne.s32.totalorder %s90, %s91
    %p103 = scmp.eq.s32.totalorder %s18, 11
    %p104 = por %p102, %p103
    %p106 = scmp.ne.s32.totalorder %s91, %s105
    %p107 = scmp.eq.s32.totalorder %s18, 0
    %p108 = por %p106, %p107
    %s110 = sadd.s32 %s109, 1
    %p113 = scmp.eq.s32.totalorder %s12, 11
    %p114 = scmp.ne.s32.totalorder %s109, %s111
    %p115 = scmp.eq.s32.totalorder %s12, 0
    %p116 = por %p114, %p115
    %p117 = scmp.ne.s32.totalorder %s109, %s111
    %p118 = scmp.eq.s32.totalorder %s17, 11
    %p119 = por %p117, %p118
    %p120 = scmp.ne.s32.totalorder %s111, %s112
    %p121 = scmp.eq.s32.totalorder %s17, 0
    %p122 = por %p120, %p121
    %p123 = scmp.ne.s32.totalorder %s111, %s112
    %p124 = scmp.eq.s32.totalorder %s18, 11
    %p125 = por %p123, %p124
    %p127 = scmp.ne.s32.totalorder %s112, %s126
    %p128 = scmp.eq.s32.totalorder %s18, 0
    %p129 = por %p127, %p128
    %s131 = sadd.s32 %s130, 1
    %p134 = scmp.eq.s32.totalorder %s12, 11
    %p135 = scmp.ne.s32.totalorder %s130, %s132
    %p136 = scmp.eq.s32.totalorder %s12, 0
    %p137 = por %p135, %p136
    %p138 = scmp.ne.s32.totalorder %s130, %s132
    %p139 = scmp.eq.s32.totalorder %s17, 11
    %p140 = por %p138, %p139
    %p141 = scmp.ne.s32.totalorder %s132, %s133
    %p142 = scmp.eq.s32.totalorder %s17, 0
    %p143 = por %p141, %p142
    %p144 = scmp.ne.s32.totalorder %s132, %s133
    %p145 = scmp.eq.s32.totalorder %s18, 11
    %p146 = por %p144, %p145
    %p148 = scmp.ne.s32.totalorder %s133, %s147
    %p149 = scmp.eq.s32.totalorder %s18, 0
    %p150 = por %p148, %p149
    %s152 = sadd.s32 %s151, 1
    %p155 = scmp.eq.s32.totalorder %s12, 11
    %p156 = scmp.ne.s32.totalorder %s151, %s153
    %p157 = scmp.eq.s32.totalorder %s12, 0
    %p158 = por %p156, %p157
    %p159 = scmp.ne.s32.totalorder %s151, %s153
    %p160 = scmp.eq.s32.totalorder %s17, 11
    %p161 = por %p159, %p160
    %p162 = scmp.ne.s32.totalorder %s153, %s154
    %p163 = scmp.eq.s32.totalorder %s17, 0
    %p164 = por %p162, %p163
    %p165 = scmp.ne.s32.totalorder %s153, %s154
    %p166 = scmp.eq.s32.totalorder %s18, 11
    %p167 = por %p165, %p166
    %p169 = scmp.ne.s32.totalorder %s154, %s168
    %p170 = scmp.eq.s32.totalorder %s18, 0
    %p171 = por %p169, %p170
    %p172 = scmp.eq.s32.totalorder %s19, 2
    %s173 = scalar_select %p172, %s20, 0
    %s174 = scalar_select %p172, %s21, 0
    %p175 = scmp.eq.s32.totalorder %s38, 2
    %s176 = scalar_select %p175, %s34, 0
    %s177 = scalar_select %p175, %s30, 0
    %s178 = ssub.s32 %s173, %s176
    %s179 = ssub.s32 %s174, %s177
    %s180 = sor.u32 %s178, %s179
    %p181 = scmp.eq.s32.totalorder %s180, 0
    %s183 = sadd.s32 %s182, 1
    %s184 = scalar_select %p181, %s182, %s183
    %p187 = pneg %p181
    %p188 = scmp.eq.s32.totalorder %s12, 11
    %p189 = por %p187, %p188
    %p190 = scmp.ne.s32.totalorder %s182, %s185
    %p191 = scmp.eq.s32.totalorder %s12, 0
    %p192 = por %p190, %p191
    %p193 = scmp.ne.s32.totalorder %s182, %s185
    %p194 = scmp.eq.s32.totalorder %s17, 11
    %p195 = por %p193, %p194
    %p196 = scmp.ne.s32.totalorder %s185, %s186
    %p197 = scmp.eq.s32.totalorder %s17, 0
    %p198 = por %p196, %p197
    %p199 = scmp.ne.s32.totalorder %s185, %s186
    %p200 = scmp.eq.s32.totalorder %s18, 11
    %p201 = por %p199, %p200
    %p203 = scmp.ne.s32.totalorder %s186, %s202
    %p204 = scmp.eq.s32.totalorder %s18, 0
    %p205 = por %p203, %p204
    %p206 = scmp.le.s32.totalorder 1, %s12
    %p207 = scmp.lt.s32.totalorder %s12, 13
    %p208 = pnand %p206, %p207
    %p209 = pneg %p208
    // Predicated region
    $region9: #{conv_batch_relu.1} parent=5 // pred_check
      _
    $region10: #{conv_batch_relu.1} parent=5 // pred_check_branch
      %211 = sbr.rel (%p208) target = $region12
    $region11: #{conv_batch_relu.1} parent=5 // pred_region
      %s212 = ssub.s32 %s12, 1
      // Predicated region
      $region13: #{conv_batch_relu.1} parent=11 // pred_check
        %p213 = pneg %p80
      $region14: #{conv_batch_relu.1} parent=11 // pred_check_branch
        %215 = sbr.rel (%p213) target = $region16
      $region15: #{conv_batch_relu.1} parent=11 // pred_region
        _
      $region16: #{conv_batch_relu.1} parent=11 // pred_fallthru
        _
      // Predicated region
      $region17: #{conv_batch_relu.1} parent=11 // pred_check
        %p216 = pneg %p101
      $region18: #{conv_batch_relu.1} parent=11 // pred_check_branch
        %218 = sbr.rel (%p216) target = $region20
      $region19: #{conv_batch_relu.1} parent=11 // pred_region
        _
      $region20: #{conv_batch_relu.1} parent=11 // pred_fallthru
        _
      // Predicated region
      $region21: #{conv_batch_relu.1} parent=11 // pred_check
        %p219 = pneg %p122
      $region22: #{conv_batch_relu.1} parent=11 // pred_check_branch
        %221 = sbr.rel (%p219) target = $region24
      $region23: #{conv_batch_relu.1} parent=11 // pred_region
        _
      $region24: #{conv_batch_relu.1} parent=11 // pred_fallthru
        _
      // Predicated region
      $region25: #{conv_batch_relu.1} parent=11 // pred_check
        %p222 = pneg %p143
      $region26: #{conv_batch_relu.1} parent=11 // pred_check_branch
        %224 = sbr.rel (%p222) target = $region28
      $region27: #{conv_batch_relu.1} parent=11 // pred_region
        _
      $region28: #{conv_batch_relu.1} parent=11 // pred_fallthru
        _
      // Predicated region
      $region29: #{conv_batch_relu.1} parent=11 // pred_check
        %p225 = pneg %p164
      $region30: #{conv_batch_relu.1} parent=11 // pred_check_branch
        %227 = sbr.rel (%p225) target = $region32
      $region31: #{conv_batch_relu.1} parent=11 // pred_region
        _
      $region32: #{conv_batch_relu.1} parent=11 // pred_fallthru
        _
    $region12: #{conv_batch_relu.1} parent=5 // pred_fallthru
      _
    %p228 = scmp.lt.s32.totalorder %s12, 12
    // Predicated region
    $region33: #{conv_batch_relu.1} parent=5 // pred_check
      %p229 = pneg %p228
    $region34: #{conv_batch_relu.1} parent=5 // pred_check_branch
      %231 = sbr.rel (%p229) target = $region36
    $region35: #{conv_batch_relu.1} parent=5 // pred_region
      // Predicated region
      $region37: #{conv_batch_relu.1} parent=35 // pred_check
        %p232 = pneg %p53
      $region38: #{conv_batch_relu.1} parent=35 // pred_check_branch
        %234 = sbr.rel (%p232) target = $region40
      $region39: #{conv_batch_relu.1} parent=35 // pred_region
        %p235 = scmp.lt.s32.totalorder %s20, 1
        %s236 = scalar_select %p235, %s20, 1
        %p237 = scmp.lt.s32.totalorder %s21, 1
        %s238 = scalar_select %p237, %s21, 1
        %s239 = smul.addr %s238, 2
        %s240 = smul.addr %s236, 4
        %s241 = sadd.s32 %s239, %s240
        %s242 = smul.addr %s241, 8
        %s243 = scalar_lea.vmem %s0, %s242
      $region40: #{conv_batch_relu.1} parent=35 // pred_fallthru
        _
    $region36: #{conv_batch_relu.1} parent=5 // pred_fallthru
      _
    %p244 = scmp.le.s32.totalorder 1, %s12
    %p245 = scmp.lt.s32.totalorder %s12, 13
    %p246 = pnand %p244, %p245
    %p247 = pneg %p246
    // Predicated region
    $region41: #{conv_batch_relu.1} parent=5 // pred_check
      _
    $region42: #{conv_batch_relu.1} parent=5 // pred_check_branch
      %249 = sbr.rel (%p246) target = $region44
    $region43: #{conv_batch_relu.1} parent=5 // pred_region
      %s250 = ssub.s32 %s12, 1
      %p251 = scmp.lt.s32.totalorder %s23, 1
      %s252 = scalar_select %p251, %s23, 1
      %p253 = scmp.lt.s32.totalorder %s24, 1
      %s254 = scalar_select %p253, %s24, 1
      %s255 = smul.addr %s254, 2
      %s256 = smul.addr %s252, 4
      %s257 = sadd.s32 %s255, %s256
      %s258 = smul.addr %s257, 8
      %s259 = scalar_lea.vmem %s0, %s258
      %p260 = pneg %p59
      %p261 = pneg %p56
      %p262 = pneg %p80
      %p263 = pneg %p77
      %p264 = pneg %p101
      %p265 = pneg %p98
      %p266 = pneg %p122
      %p267 = pneg %p119
      %p268 = pneg %p143
      %p269 = pneg %p140
      %p270 = pneg %p164
      %p271 = pneg %p161
      %p272 = pneg %p198
      %p273 = pneg %p195
      %p274 = scmp.eq.s32.totalorder %s22, 2
      %s275 = scalar_select %p274, %s23, 0
      %s276 = scalar_select %p274, %s24, 0
      %p277 = scmp.lt.s32.totalorder %s275, 1
      %s278 = scalar_select %p277, %s275, 1
      %p279 = scmp.lt.s32.totalorder %s276, 1
      %s280 = scalar_select %p279, %s276, 1
      %s281 = smul.addr %s278, 2
      %s282 = sadd.s32 %s280, %s281
      %s283 = smul.addr %s282, 8
      %s284 = scalar_lea.vmem %s6, %s283
      %p285 = scmp.lt.s32.totalorder %s23, 1
      %s286 = scalar_select %p285, %s23, 1
      %p287 = scmp.lt.s32.totalorder %s24, 1
      %s288 = scalar_select %p287, %s24, 1
      %s289 = smul.addr %s288, 2
      %s290 = smul.addr %s286, 4
      %s291 = sadd.s32 %s289, %s290
      %s292 = smul.addr %s291, 8
      %s293 = scalar_lea.vmem %s0, %s292
      %p294 = scmp.eq.s32.totalorder %s22, 2
      %s295 = scalar_select %p294, %s23, 0
      %s296 = scalar_select %p294, %s24, 0
      %p297 = scmp.lt.s32.totalorder %s295, 1
      %s298 = scalar_select %p297, %s295, 1
      %p299 = scmp.lt.s32.totalorder %s296, 1
      %s300 = scalar_select %p299, %s296, 1
      %s301 = smul.addr %s298, 2
      %s302 = sadd.s32 %s300, %s301
      %s303 = smul.addr %s302, 8
      %s304 = scalar_lea.vmem %s6, %s303
      %p305 = scmp.eq.s32.totalorder %s22, 2
      %s306 = scalar_select %p305, %s23, 0
      %s307 = scalar_select %p305, %s24, 0
      %p308 = scmp.eq.s32.totalorder %s23, 0
      %p309 = scmp.eq.s32.totalorder %s24, 0
      %p310 = pnand %p308, %p309
      %p311 = pneg %p310
      %p312 = scmp.eq.s32.totalorder %s23, 1
      %p313 = scmp.eq.s32.totalorder %s24, 1
      %p314 = pnand %p312, %p313
      %p315 = pneg %p314
      %v316 = vld [vmem:[%s293] sm:$0xff]
      %v317 = vld [vmem:[%s293 + $0x8] sm:$0x3]
      %vm320 = vcmask 1046528
      %v321 = vrot.slane %v316, 1
      %v322 = vrot.slane %v317, 1
      %v323 = vsel %vm320, %v321, %v322
      %324 = vrot.lane.b32.xlu0 %v323, 72
      %v325 = vpop.permute.xlu0 %324
      %vm327 = vcmask 1045504
      %v328 = vrot.slane %v316, 2
      %v329 = vrot.slane %v317, 2
      %v330 = vsel %vm327, %v328, %v329
      %331 = vrot.lane.b32.xlu0 %v330, 16
      %v332 = vpop.permute.xlu0 %331
      %vm334 = vcmask 588800
      %v335 = vsel %vm334, %v316, %v325
      %vm336 = vcmask 130048
      %v337 = vsel %vm336, %v325, %v332
      %v338 = vld [vmem:[%s1] sm:$0xff]
      %v339 = vld [vmem:[%s1 + $0x8] sm:$0xff]
      %v340 = vld [vmem:[%s1 + $0x10] sm:$0xff]
      %v341 = vld [vmem:[%s1 + $0x18] sm:$0xff]
      %v342 = vld [vmem:[%s1 + $0x20] sm:$0xff]
      %v343 = vld [vmem:[%s1 + $0x28] sm:$0xff]
      %v344 = vld [vmem:[%s1 + $0x30] sm:$0xff]
      %v345 = vld [vmem:[%s1 + $0x38] sm:$0xff]
      %v346 = vld [vmem:[%s1 + $0x40] sm:$0xff]
      %v347 = vld [vmem:[%s1 + $0x48] sm:$0xff]
      %v348 = vld [vmem:[%s1 + $0x50] sm:$0xff]
      %v349 = vld [vmem:[%s1 + $0x58] sm:$0xff]
      %v350 = vld [vmem:[%s1 + $0x60] sm:$0xff]
      %v351 = vld [vmem:[%s1 + $0x68] sm:$0xff]
      %v352 = vld [vmem:[%s1 + $0x70] sm:$0xff]
      %v353 = vld [vmem:[%s1 + $0x78] sm:$0xff]
      %v354 = vld [vmem:[%s1 + $0x80] sm:$0xff]
      %v355 = vld [vmem:[%s1 + $0x88] sm:$0xff]
      %v356 = vld [vmem:[%s1 + $0x90] sm:$0xff]
      %v357 = vld [vmem:[%s1 + $0x98] sm:$0xff]
      %v358 = vld [vmem:[%s1 + $0xa0] sm:$0xff]
      %v359 = vld [vmem:[%s1 + $0xa8] sm:$0xff]
      %v360 = vld [vmem:[%s1 + $0xb0] sm:$0xff]
      %v361 = vld [vmem:[%s1 + $0xb8] sm:$0xff]
      %v362 = vld [vmem:[%s1 + $0xc0] sm:$0xff]
      %v363 = vld [vmem:[%s1 + $0xc8] sm:$0xff]
      %v364 = vld [vmem:[%s1 + $0xd0] sm:$0xff]
      %vm365 = vcmask 719872
      %v367 = vsel %vm365, %v337, 0
      %369 = vmatpush.msra.mxu0 %v353
      %370 = vmatpush.msra.mxu0 %v352
      %371 = vmatpush.msra.mxu0 %v351
      %372 = vmatpush.msra.mxu0 %v350
      %373 = vmatpush.msra.mxu0 %v349
      %374 = vmatpush.msra.mxu0 %v348
      %375 = vmatpush.msra.mxu0 %v347
      %376 = vmatpush.msra.mxu0 %v346
      %377 = vmatpush.msra.mxu0 %v345
      %378 = vmatpush.msra.mxu0 %v344
      %379 = vmatpush.msra.mxu0 %v343
      %380 = vmatpush.msra.mxu0 %v342
      %381 = vmatpush.msra.mxu0 %v341
      %382 = vmatpush.msra.mxu0 %v340
      %383 = vmatpush.msra.mxu0 %v339
      %384 = vmatpush.msra.mxu0 %v338
      %385 = vmatmul.f32.gmra.mxu0 %v335
      %v386 = vpop.f32.mrf.mxu0
      %v387 = vadd.f32 0.0, %v386
      %388 = vdwg.mxu0
      %389 = vmatpush.msra.mxu0 0.0
      %390 = vmatpush.msra.mxu0 0.0
      %391 = vmatpush.msra.mxu0 0.0
      %392 = vmatpush.msra.mxu0 0.0
      %393 = vmatpush.msra.mxu0 0.0
      %394 = vmatpush.msra.mxu0 %v364
      %395 = vmatpush.msra.mxu0 %v363
      %396 = vmatpush.msra.mxu0 %v362
      %397 = vmatpush.msra.mxu0 %v361
      %398 = vmatpush.msra.mxu0 %v360
      %399 = vmatpush.msra.mxu0 %v359
      %400 = vmatpush.msra.mxu0 %v358
      %401 = vmatpush.msra.mxu0 %v357
      %402 = vmatpush.msra.mxu0 %v356
      %403 = vmatpush.msra.mxu0 %v355
      %404 = vmatpush.msra.mxu0 %v354
      %405 = vmatmul.f32.gmra.mxu0 %v367
      %v406 = vpop.f32.mrf.mxu0
      %v407 = vadd.f32 %v387, %v406
      %408 = vdwg.mxu0
      %p409 = scmp.eq.s32.totalorder %s22, 0
      %p410 = pnand %p409, %p311
      %p411 = pneg %p410
      // Predicated region
      $region45: #{conv_batch_relu.1} parent=43 // pred_check
        _
      $region46: #{conv_batch_relu.1} parent=43 // pred_check_branch
        %413 = sbr.rel (%p410) target = $region48
      $region47: #{conv_batch_relu.1} parent=43 // pred_region
        %414 = vst [vmem:[#allocation2] sm:$0x3] 0.0
      $region48: #{conv_batch_relu.1} parent=43 // pred_fallthru
        _
      // Predicated region
      $region49: #{conv_batch_relu.1} parent=43 // pred_check
        %p415 = pneg %p409
      $region50: #{conv_batch_relu.1} parent=43 // pred_check_branch
        %417 = sbr.rel (%p415) target = $region52
      $region51: #{conv_batch_relu.1} parent=43 // pred_region
        %v418 = vld [vmem:[#allocation2] sm:$0x1]
        %v419 = vrot.slane %v407, 4
        %v420 = vadd.f32 %v407, %v419
        %v421 = vrot.slane %v420, 2
        %v422 = vadd.f32 %v420, %v421
        %v423 = vrot.slane %v422, 1
        %v424 = vadd.f32 %v422, %v423
        %v425 = vadd.f32 %v418, %v424
        %426 = vst [vmem:[#allocation2] sm:$0x1] %v425
      $region52: #{conv_batch_relu.1} parent=43 // pred_fallthru
        _
      %p427 = pnand %p409, %p315
      %p428 = pneg %p427
      // Predicated region
      $region53: #{conv_batch_relu.1} parent=43 // pred_check
        _
      $region54: #{conv_batch_relu.1} parent=43 // pred_check_branch
        %430 = sbr.rel (%p427) target = $region56
      $region55: #{conv_batch_relu.1} parent=43 // pred_region
        %v431 = vld [vmem:[#allocation2] sm:$0x1]
        %v432 = vld [vmem:[%s4] sm:$0xff]
        %v433 = vld [vmem:[%s4 + $0x8] sm:$0xff]
        %v434 = vld [vmem:[%s4 + $0x10] sm:$0xff]
        %v435 = vld [vmem:[%s4 + $0x18] sm:$0xff]
        %v436 = vld [vmem:[%s4 + $0x20] sm:$0xff]
        %v437 = vld [vmem:[%s4 + $0x28] sm:$0xff]
        %v438 = vld [vmem:[%s4 + $0x30] sm:$0xff]
        %v439 = vld [vmem:[%s4 + $0x38] sm:$0xff]
        %v440 = vld [vmem:[%s4 + $0x40] sm:$0xff]
        %v441 = vld [vmem:[%s4 + $0x48] sm:$0xff]
        %v442 = vld [vmem:[%s4 + $0x50] sm:$0xff]
        %v443 = vld [vmem:[%s4 + $0x58] sm:$0xff]
        %v444 = vld [vmem:[%s4 + $0x60] sm:$0xff]
        %v445 = vld [vmem:[%s4 + $0x68] sm:$0xff]
        %v446 = vld [vmem:[%s4 + $0x70] sm:$0xff]
        %v447 = vld [vmem:[%s4 + $0x78] sm:$0xff]
        %448 = vmatpush.msra.mxu0 %v447
        %449 = vmatpush.msra.mxu0 %v446
        %450 = vmatpush.msra.mxu0 %v445
        %451 = vmatpush.msra.mxu0 %v444
        %452 = vmatpush.msra.mxu0 %v443
        %453 = vmatpush.msra.mxu0 %v442
        %454 = vmatpush.msra.mxu0 %v441
        %455 = vmatpush.msra.mxu0 %v440
        %456 = vmatpush.msra.mxu0 %v439
        %457 = vmatpush.msra.mxu0 %v438
        %458 = vmatpush.msra.mxu0 %v437
        %459 = vmatpush.msra.mxu0 %v436
        %460 = vmatpush.msra.mxu0 %v435
        %461 = vmatpush.msra.mxu0 %v434
        %462 = vmatpush.msra.mxu0 %v433
        %463 = vmatpush.msra.mxu0 %v432
        %464 = vmatmul.f32.gmra.mxu0 %v431
        %v465 = vpop.f32.mrf.mxu0
        %v466 = vadd.f32 0.0, %v465
        %467 = vdwg.mxu0
        %v468 = vrcp.pop 512.0
        %v469 = vmul.f32 512.0, %v468
        %v470 = vsub.f32 1.0, %v469
        %v471 = vmul.f32 %v468, %v470
        %v472 = vadd.f32 %v468, %v471
        %vm473 = vweird.f32 %v468
        %v474 = vsel %vm473, %v468, %v472
        %v475 = vmul.f32 %v466, %v474
        %v476 = vld [vmem:[%s5] sm:$0xff]
        %vm477 = vcmask 64512
        %v479 = vsel %vm477, %v475, 0
        %481 = vmatpush.msra.mxu0 0.0
        %482 = vmatpush.msra.mxu0 0.0
        %483 = vmatpush.msra.mxu0 0.0
        %484 = vmatpush.msra.mxu0 0.0
        %485 = vmatpush.msra.mxu0 0.0
        %486 = vmatpush.msra.mxu0 0.0
        %487 = vmatpush.msra.mxu0 0.0
        %488 = vmatpush.msra.mxu0 0.0
        %489 = vmatpush.msra.mxu0 0.0
        %490 = vmatpush.msra.mxu0 0.0
        %491 = vmatpush.msra.mxu0 0.0
        %492 = vmatpush.msra.mxu0 0.0
        %493 = vmatpush.msra.mxu0 0.0
        %494 = vmatpush.msra.mxu0 0.0
        %495 = vmatpush.msra.mxu0 0.0
        %496 = vmatpush.msra.mxu0 %v476
        %497 = vmatmul.f32.gmra.mxu0 %v479
        %v498 = vpop.f32.mrf.mxu0
        %v499 = vadd.f32 0.0, %v498
        %500 = vdwg.mxu0
        %501 = vst [vmem:[#allocation3] sm:$0x1] %v499
      $region56: #{conv_batch_relu.1} parent=43 // pred_fallthru
        _
      %p502 = scmp.eq.s32.totalorder %s22, 1
      // Predicated region
      $region57: #{conv_batch_relu.1} parent=43 // pred_check
        %p503 = pneg %p502
      $region58: #{conv_batch_relu.1} parent=43 // pred_check_branch
        %505 = sbr.rel (%p503) target = $region60
      $region59: #{conv_batch_relu.1} parent=43 // pred_region
        %v506 = vld [vmem:[#allocation3] sm:$0x1]
        %v507 = vperm.slane %v506, 0
        %v508 = vsub.f32 %v407, %v507
        %v509 = vld [vmem:[#allocation2 + $0x1] sm:$0x1]
        %v510 = vmul.f32 %v508, %v508
        %v511 = vrot.slane %v510, 4
        %v512 = vadd.f32 %v510, %v511
        %v513 = vrot.slane %v512, 2
        %v514 = vadd.f32 %v512, %v513
        %v515 = vrot.slane %v514, 1
        %v516 = vadd.f32 %v514, %v515
        %v517 = vadd.f32 %v509, %v516
        %518 = vst [vmem:[#allocation2 + $0x1] sm:$0x1] %v517
      $region60: #{conv_batch_relu.1} parent=43 // pred_fallthru
        _
      %p519 = pnand %p502, %p315
      %p520 = pneg %p519
      // Predicated region
      $region61: #{conv_batch_relu.1} parent=43 // pred_check
        _
      $region62: #{conv_batch_relu.1} parent=43 // pred_check_branch
        %522 = sbr.rel (%p519) target = $region64
      $region63: #{conv_batch_relu.1} parent=43 // pred_region
        %v523 = vld [vmem:[#allocation2 + $0x1] sm:$0x1]
        %v524 = vld [vmem:[%s4] sm:$0xff]
        %v525 = vld [vmem:[%s4 + $0x8] sm:$0xff]
        %v526 = vld [vmem:[%s4 + $0x10] sm:$0xff]
        %v527 = vld [vmem:[%s4 + $0x18] sm:$0xff]
        %v528 = vld [vmem:[%s4 + $0x20] sm:$0xff]
        %v529 = vld [vmem:[%s4 + $0x28] sm:$0xff]
        %v530 = vld [vmem:[%s4 + $0x30] sm:$0xff]
        %v531 = vld [vmem:[%s4 + $0x38] sm:$0xff]
        %v532 = vld [vmem:[%s4 + $0x40] sm:$0xff]
        %v533 = vld [vmem:[%s4 + $0x48] sm:$0xff]
        %v534 = vld [vmem:[%s4 + $0x50] sm:$0xff]
        %v535 = vld [vmem:[%s4 + $0x58] sm:$0xff]
        %v536 = vld [vmem:[%s4 + $0x60] sm:$0xff]
        %v537 = vld [vmem:[%s4 + $0x68] sm:$0xff]
        %v538 = vld [vmem:[%s4 + $0x70] sm:$0xff]
        %v539 = vld [vmem:[%s4 + $0x78] sm:$0xff]
        %540 = vmatpush.msra.mxu0 %v539
        %541 = vmatpush.msra.mxu0 %v538
        %542 = vmatpush.msra.mxu0 %v537
        %543 = vmatpush.msra.mxu0 %v536
        %544 = vmatpush.msra.mxu0 %v535
        %545 = vmatpush.msra.mxu0 %v534
        %546 = vmatpush.msra.mxu0 %v533
        %547 = vmatpush.msra.mxu0 %v532
        %548 = vmatpush.msra.mxu0 %v531
        %549 = vmatpush.msra.mxu0 %v530
        %550 = vmatpush.msra.mxu0 %v529
        %551 = vmatpush.msra.mxu0 %v528
        %552 = vmatpush.msra.mxu0 %v527
        %553 = vmatpush.msra.mxu0 %v526
        %554 = vmatpush.msra.mxu0 %v525
        %555 = vmatpush.msra.mxu0 %v524
        %556 = vmatmul.f32.gmra.mxu0 %v523
        %v557 = vpop.f32.mrf.mxu0
        %v558 = vadd.f32 0.0, %v557
        %559 = vdwg.mxu0
        %v560 = vrcp.pop 512.0
        %v561 = vmul.f32 512.0, %v560
        %v562 = vsub.f32 1.0, %v561
        %v563 = vmul.f32 %v560, %v562
        %v564 = vadd.f32 %v560, %v563
        %vm565 = vweird.f32 %v560
        %v566 = vsel %vm565, %v560, %v564
        %v567 = vmul.f32 %v558, %v566
        %v568 = vld [vmem:[#allocation2] sm:$0x1]
        %569 = vmatpush.msra.mxu0 %v539
        %570 = vmatpush.msra.mxu0 %v538
        %571 = vmatpush.msra.mxu0 %v537
        %572 = vmatpush.msra.mxu0 %v536
        %573 = vmatpush.msra.mxu0 %v535
        %574 = vmatpush.msra.mxu0 %v534
        %575 = vmatpush.msra.mxu0 %v533
        %576 = vmatpush.msra.mxu0 %v532
        %577 = vmatpush.msra.mxu0 %v531
        %578 = vmatpush.msra.mxu0 %v530
        %579 = vmatpush.msra.mxu0 %v529
        %580 = vmatpush.msra.mxu0 %v528
        %581 = vmatpush.msra.mxu0 %v527
        %582 = vmatpush.msra.mxu0 %v526
        %583 = vmatpush.msra.mxu0 %v525
        %584 = vmatpush.msra.mxu0 %v524
        %585 = vmatmul.f32.gmra.mxu0 %v568
        %v586 = vpop.f32.mrf.mxu0
        %v587 = vadd.f32 0.0, %v586
        %588 = vdwg.mxu0
        %v589 = vmul.f32 %v587, %v566
        %v590 = vadd.f32 %v567, 1e-05
        %v591 = vrsqrt.pop %v590
        %v592 = vmul.f32 %v591, %v590
        %v593 = vmul.f32 %v592, %v591
        %v594 = vmul.f32 0.5, %v593
        %v595 = vsub.f32 1.5, %v594
        %v596 = vmul.f32 %v591, %v595
        %vm597 = vweird.f32 %v590
        %vm598 = vweird.f32 %v591
        %vm599 = vmor %vm597, %vm598
        %v600 = vsel %vm599, %v591, %v596
        %v601 = vld [vmem:[%s2] sm:$0x1]
        %v602 = vmul.f32 %v601, %v600
        %v603 = vld [vmem:[%s3] sm:$0x1]
        %v604 = vmul.f32 %v589, %v602
        %v605 = vsub.f32 %v603, %v604
        %v606 = vld [vmem:[%s5] sm:$0xff]
        %vm607 = vcmask 64512
        %v609 = vsel %vm607, %v602, 0
        %611 = vmatpush.msra.mxu0 0.0
        %612 = vmatpush.msra.mxu0 0.0
        %613 = vmatpush.msra.mxu0 0.0
        %614 = vmatpush.msra.mxu0 0.0
        %615 = vmatpush.msra.mxu0 0.0
        %616 = vmatpush.msra.mxu0 0.0
        %617 = vmatpush.msra.mxu0 0.0
        %618 = vmatpush.msra.mxu0 0.0
        %619 = vmatpush.msra.mxu0 0.0
        %620 = vmatpush.msra.mxu0 0.0
        %621 = vmatpush.msra.mxu0 0.0
        %622 = vmatpush.msra.mxu0 0.0
        %623 = vmatpush.msra.mxu0 0.0
        %624 = vmatpush.msra.mxu0 0.0
        %625 = vmatpush.msra.mxu0 0.0
        %626 = vmatpush.msra.mxu0 %v606
        %627 = vmatmul.f32.gmra.mxu0 %v609
        %v628 = vpop.f32.mrf.mxu0
        %v629 = vadd.f32 0.0, %v628
        %630 = vdwg.mxu0
        %631 = vst [vmem:[#allocation3] sm:$0x1] %v629
        %v632 = vld [vmem:[%s5] sm:$0xff]
        %v634 = vsel %vm607, %v605, 0
        %636 = vmatpush.msra.mxu0 0.0
        %637 = vmatpush.msra.mxu0 0.0
        %638 = vmatpush.msra.mxu0 0.0
        %639 = vmatpush.msra.mxu0 0.0
        %640 = vmatpush.msra.mxu0 0.0
        %641 = vmatpush.msra.mxu0 0.0
        %642 = vmatpush.msra.mxu0 0.0
        %643 = vmatpush.msra.mxu0 0.0
        %644 = vmatpush.msra.mxu0 0.0
        %645 = vmatpush.msra.mxu0 0.0
        %646 = vmatpush.msra.mxu0 0.0
        %647 = vmatpush.msra.mxu0 0.0
        %648 = vmatpush.msra.mxu0 0.0
        %649 = vmatpush.msra.mxu0 0.0
        %650 = vmatpush.msra.mxu0 0.0
        %651 = vmatpush.msra.mxu0 %v632
        %652 = vmatmul.f32.gmra.mxu0 %v634
        %v653 = vpop.f32.mrf.mxu0
        %v654 = vadd.f32 0.0, %v653
        %655 = vdwg.mxu0
        %656 = vst [vmem:[#allocation3 + $0x1] sm:$0x1] %v654
      $region64: #{conv_batch_relu.1} parent=43 // pred_fallthru
        _
      %p657 = scmp.eq.s32.totalorder %s22, 2
      // Predicated region
      $region65: #{conv_batch_relu.1} parent=43 // pred_check
        %p658 = pneg %p657
      $region66: #{conv_batch_relu.1} parent=43 // pred_check_branch
        %660 = sbr.rel (%p658) target = $region68
      $region67: #{conv_batch_relu.1} parent=43 // pred_region
        %v661 = vld [vmem:[#allocation3] sm:$0x1]
        %v662 = vperm.slane %v661, 0
        %v663 = vmul.f32 %v407, %v662
        %v664 = vld [vmem:[#allocation3 + $0x1] sm:$0x1]
        %v665 = vperm.slane %v664, 0
        %v666 = vadd.f32 %v663, %v665
        %v667 = vmax.f32 %v666, 0.0
        %668 = vst [vmem:[%s304] sm:$0xff] %v667
      $region68: #{conv_batch_relu.1} parent=43 // pred_fallthru
        _
      %p669 = scmp.eq.s32.totalorder %s22, 2
      %s670 = scalar_select %p669, %s23, 0
      %s671 = scalar_select %p669, %s24, 0
      %p672 = scmp.lt.s32.totalorder %s670, 1
      %s673 = scalar_select %p672, %s670, 1
      %p674 = scmp.lt.s32.totalorder %s671, 1
      %s675 = scalar_select %p674, %s671, 1
      %s676 = smul.addr %s673, 2
      %s677 = sadd.s32 %s675, %s676
      %s678 = smul.addr %s677, 8
      %s679 = scalar_lea.vmem %s6, %s678
      // Predicated region
      $region69: #{conv_batch_relu.1} parent=43 // pred_check
        %p680 = pneg %p195
      $region70: #{conv_batch_relu.1} parent=43 // pred_check_branch
        %682 = sbr.rel (%p680) target = $region72
      $region71: #{conv_batch_relu.1} parent=43 // pred_region
        %p683 = scmp.eq.s32.totalorder %s22, 2
        %s684 = scalar_select %p683, %s23, 0
        %s685 = scalar_select %p683, %s24, 0
      $region72: #{conv_batch_relu.1} parent=43 // pred_fallthru
        _
    $region44: #{conv_batch_relu.1} parent=5 // pred_fallthru
      _
    %p686 = scmp.le.s32.totalorder 2, %s12
    // Predicated region
    $region73: #{conv_batch_relu.1} parent=5 // pred_check
      %p687 = pneg %p686
    $region74: #{conv_batch_relu.1} parent=5 // pred_check_branch
      %689 = sbr.rel (%p687) target = $region76
    $region75: #{conv_batch_relu.1} parent=5 // pred_region
      %s690 = ssub.s32 %s12, 2
      // Predicated region
      $region77: #{conv_batch_relu.1} parent=75 // pred_check
        %p691 = pneg %p201
      $region78: #{conv_batch_relu.1} parent=75 // pred_check_branch
        %693 = sbr.rel (%p691) target = $region80
      $region79: #{conv_batch_relu.1} parent=75 // pred_region
        %p694 = scmp.eq.s32.totalorder %s25, 2
        %s695 = scalar_select %p694, %s26, 0
        %s696 = scalar_select %p694, %s27, 0
        %p697 = scmp.lt.s32.totalorder %s695, 1
        %s698 = scalar_select %p697, %s695, 1
        %p699 = scmp.lt.s32.totalorder %s696, 1
        %s700 = scalar_select %p699, %s696, 1
        %s701 = smul.addr %s698, 2
        %s702 = sadd.s32 %s700, %s701
        %s703 = smul.addr %s702, 8
        %s704 = scalar_lea.vmem %s6, %s703
      $region80: #{conv_batch_relu.1} parent=75 // pred_fallthru
        _
    $region76: #{conv_batch_relu.1} parent=5 // pred_fallthru
      _
  $region6: #{conv_batch_relu.1} parent=0 // loop_footer
    %s16 = sadd.s32 1, %s12
  $region7: #{conv_batch_relu.1} parent=0 // loop_footer_branch
    %11 = sbr.rel target = $region3
  $region8: #{conv_batch_relu.1} parent=0 // loop_exit
    _

</llo_original>
